<compile_context>
chip_gen: v7x
topology: tpu7x:2x2x1
jax: 0.10.0
libtpu: 0.0.40
codegen_flags: <defaults>
</compile_context>

<pallas_src>
import math

import jax
import jax.numpy as jnp
from jax.experimental import pallas as pl
from jax.experimental.pallas import tpu as pltpu


_INV_SQRT2 = 1.0 / math.sqrt(2.0)


def _round_up(x, m):
    return (x + m - 1) // m * m


def _gelu_exact(x):
    # torch.nn.functional.gelu default (approximate='none') = 0.5*x*(1+erf(x/sqrt(2)))
    return 0.5 * x * (1.0 + jax.lax.erf(x * _INV_SQRT2))


def _vmem_limit(estimate_bytes):
    # Keep the 32 MiB scoped default as a floor; raise (with headroom) when the
    # resident weights / larger tiles need it.  Cap at 128 MiB.
    return int(min(max(32 << 20, estimate_bytes + (8 << 20)), 128 << 20))


def _block_spec(shape, index_map, *, buffer_count=None):
    """BlockSpec with an optional buffer-count override (graceful fallback)."""
    if buffer_count is not None:
        try:
            return pl.BlockSpec(shape, index_map,
                                pipeline_mode=pl.Buffered(buffer_count))
        except (TypeError, AttributeError):
            pass
    return pl.BlockSpec(shape, index_map)


# ----------------------------------------------------------------------------
# One-time parameter preparation (hoisted out of the per-call hot path).
# ----------------------------------------------------------------------------
def prepare_siglip_mlp_params(w1, b1, w2, b2):
    """Pad the intermediate dim to a multiple of 128 and reshape biases to 2D.

    Call ONCE at model init; do not call per forward.  Zero-padded intermediate
    columns contribute gelu(0) * 0 == 0, so the result is exact.
    """
    H, I = w1.shape
    I_pad = _round_up(I, 128)
    if I_pad != I:
        w1 = jnp.pad(w1, ((0, 0), (0, I_pad - I)))
        b1 = jnp.pad(b1, ((0, I_pad - I),))
        w2 = jnp.pad(w2, ((0, I_pad - I), (0, 0)))
    return {
        "w1": w1,                      # (H, I_pad)
        "b1": b1.reshape(1, I_pad),    # (1, I_pad)
        "w2": w2,                      # (I_pad, H)
        "b2": b2.reshape(1, H),        # (1, H)
    }


# ----------------------------------------------------------------------------
# Kernels
# ----------------------------------------------------------------------------
def _mlp_resident_kernel(x_ref, w1_ref, b1_ref, w2_ref, b2_ref, o_ref):
    # W1/W2/biases are fully VMEM-resident; the grid iterates over row tiles only.
    h = jnp.dot(x_ref[...], w1_ref[...], preferred_element_type=jnp.float32)
    h = _gelu_exact(h + b1_ref[...].astype(jnp.float32))
    out = jnp.dot(h.astype(w2_ref.dtype), w2_ref[...],
                  preferred_element_type=jnp.float32)
    o_ref[...] = (out + b2_ref[...].astype(jnp.float32)).astype(o_ref.dtype)


def _mlp_streamed_kernel(x_ref, w1_ref, b1_ref, w2_ref, b2_ref, o_ref, acc_ref):
    # Weights streamed in I-slices; f32 accumulator resident across the reduction.
    k = pl.program_id(1)

    @pl.when(k == 0)
    def _init():
        # Fold the fc2 bias into the accumulator init (keeps it out of the hot loop).
        acc_ref[...] = jnp.broadcast_to(
            b2_ref[...].astype(jnp.float32), acc_ref.shape)

    h = jnp.dot(x_ref[...], w1_ref[...], preferred_element_type=jnp.float32)
    h = _gelu_exact(h + b1_ref[...].astype(jnp.float32))
    acc_ref[...] += jnp.dot(h.astype(w2_ref.dtype), w2_ref[...],
                            preferred_element_type=jnp.float32)

    @pl.when(k == pl.num_programs(1) - 1)
    def _finalize():
        o_ref[...] = acc_ref[...].astype(o_ref.dtype)


# ----------------------------------------------------------------------------
# Hot-path wrapper
# ----------------------------------------------------------------------------
def siglip_mlp_apply(x, params, *, tm=None, ti=512, weights_resident=None):
    """SiglipMLP forward.  x: (B, S, H); params from prepare_siglip_mlp_params."""
    w1, b1, w2, b2 = params["w1"], params["b1"], params["w2"], params["b2"]
    H, I_pad = w1.shape
    B, S, Hx = x.shape
    assert Hx == H
    M = B * S

    wbytes = sum(int(a.size) * a.dtype.itemsize for a in (w1, b1, w2, b2))
    if weights_resident is None:
        # bf16 production weights (~20 MB at H=1152, I=4304) fit in VMEM on
        # v5e/v6e/v7x; f32 production weights (~40 MB) fall back to streaming.
        weights_resident = wbytes <= 24 * 1024 * 1024

    # ---- row tile ----------------------------------------------------------
    if tm is None:
        tm = 512 if weights_resident else 1024
    tm = max(8, min(tm, _round_up(M, 8)))
    tm = (tm // 8) * 8
    # Prefer >= 2 row tiles so the "parallel" M axis can feed both TensorCores.
    if M > 8 and _round_up(M, tm) // tm < 2:
        tm = max(8, _round_up((M + 1) // 2, 8))
    M_pad = _round_up(M, tm)

    x2 = x.reshape(M, H)
    if M_pad != M:
        x2 = jnp.pad(x2, ((0, M_pad - M), (0, 0)))

    x_bytes = int(x2.size) * x2.dtype.itemsize
    out_bytes = M_pad * H * x.dtype.itemsize
    flops = 4 * M_pad * I_pad * H            # two matmuls, 2*M*I*H each
    transc = M_pad * I_pad                   # one erf per intermediate element

    if weights_resident:
        grid = (M_pad // tm,)
        # VMEM budget: weights (conservatively x2 in case single-buffering is
        # unavailable) + double-buffered x/out tiles + f32 GELU intermediate.
        vmem_est = (2 * wbytes
                    + 2 * tm * H * x.dtype.itemsize
                    + 2 * tm * H * x.dtype.itemsize
                    + 2 * tm * I_pad * 4)
        cost = pl.CostEstimate(flops=flops, transcendentals=transc,
                               bytes_accessed=x_bytes + wbytes + out_bytes)

        def _call(weight_buffers):
            return pl.pallas_call(
                _mlp_resident_kernel,
                out_shape=jax.ShapeDtypeStruct((M_pad, H), x.dtype),
                grid_spec=pltpu.PrefetchScalarGridSpec(
                    num_scalar_prefetch=0,
                    grid=grid,
                    in_specs=[
                        pl.BlockSpec((tm, H), lambda i: (i, 0)),             # x tile
                        _block_spec((H, I_pad), lambda i: (0, 0),
                                    buffer_count=weight_buffers),            # W1
                        _block_spec((1, I_pad), lambda i: (0, 0),
                                    buffer_count=weight_buffers),            # b1
                        _block_spec((I_pad, H), lambda i: (0, 0),
                                    buffer_count=weight_buffers),            # W2
                        _block_spec((1, H), lambda i: (0, 0),
                                    buffer_count=weight_buffers),            # b2
                    ],
                    out_specs=pl.BlockSpec((tm, H), lambda i: (i, 0)),
                ),
                compiler_params=pltpu.CompilerParams(
                    dimension_semantics=("parallel",),
                    vmem_limit_bytes=_vmem_limit(vmem_est)),
                cost_estimate=cost,
            )(x2, w1, b1, w2, b2)

        try:
            out = _call(1)           # single-buffered resident weights
        except Exception:            # pragma: no cover - older pipeline_mode path
            out = _call(None)        # default buffering (constant index => 1 DMA)
    else:
        # ---- streamed I-reduction fallback ---------------------------------
        ti = max(128, min(ti, I_pad))
        ti = (ti // 128) * 128
        while I_pad % ti:
            ti -= 128
        grid = (M_pad // tm, I_pad // ti)
        m_tiles = grid[0]

        wdt = w1.dtype.itemsize
        vmem_est = (2 * tm * H * x.dtype.itemsize          # x tiles
                    + 2 * H * ti * wdt + 2 * ti * H * wdt  # W1/W2 slices (double buf)
                    + 2 * ti * wdt + 2 * H * wdt           # biases
                    + tm * H * 4                           # f32 accumulator
                    + 2 * tm * H * x.dtype.itemsize        # out tiles
                    + 2 * tm * ti * 4)                     # f32 intermediate + temps
        # Weights are re-streamed once per row tile in this variant.
        cost = pl.CostEstimate(flops=flops, transcendentals=transc,
                               bytes_accessed=x_bytes + m_tiles * wbytes + out_bytes)

        out = pl.pallas_call(
            _mlp_streamed_kernel,
            out_shape=jax.ShapeDtypeStruct((M_pad, H), x.dtype),
            grid_spec=pltpu.PrefetchScalarGridSpec(
                num_scalar_prefetch=0,
                grid=grid,
                in_specs=[
                    pl.BlockSpec((tm, H), lambda i, k: (i, 0)),   # x row tile
                    pl.BlockSpec((H, ti), lambda i, k: (0, k)),   # W1 I-slice
                    pl.BlockSpec((1, ti), lambda i, k: (0, k)),   # b1 I-slice
                    pl.BlockSpec((ti, H), lambda i, k: (k, 0)),   # W2 I-slice
                    pl.BlockSpec((1, H), lambda i, k: (0, 0)),    # b2 (resident)
                ],
                out_specs=pl.BlockSpec((tm, H), lambda i, k: (i, 0)),
                scratch_shapes=[pltpu.VMEM((tm, H), jnp.float32)],
            ),
            compiler_params=pltpu.CompilerParams(
                dimension_semantics=("parallel", "arbitrary"),
                vmem_limit_bytes=_vmem_limit(vmem_est)),
            cost_estimate=cost,
        )(x2, w1, b1, w2, b2)

    if M_pad != M:
        out = out[:M]
    return out.reshape(B, S, H)


def siglip_mlp(x, w1, b1, w2, b2, **kwargs):
    """Convenience wrapper.  For production, hoist prepare_siglip_mlp_params()."""
    return siglip_mlp_apply(x, prepare_siglip_mlp_params(w1, b1, w2, b2), **kwargs)


def siglip_mlp_ref(x, w1, b1, w2, b2):
    h = jnp.dot(x, w1) + b1
    h = _gelu_exact(h)
    return jnp.dot(h, w2) + b2


if __name__ == "__main__":
    key = jax.random.PRNGKey(0)
    kx, k1, k2, k3, k4 = jax.random.split(key, 5)

    # Small config consistent with SiglipMLP: hidden_size=32, intermediate_size=256.
    B, S, H, I = 2, 8, 32, 256
    x = jax.random.normal(kx, (B, S, H), dtype=jnp.float32)
    w1 = jax.random.normal(k1, (H, I), dtype=jnp.float32) * (1.0 / math.sqrt(H))
    b1 = jax.random.normal(k2, (I,), dtype=jnp.float32) * 0.01
    w2 = jax.random.normal(k3, (I, H), dtype=jnp.float32) * (1.0 / math.sqrt(I))
    b2 = jax.random.normal(k4, (H,), dtype=jnp.float32) * 0.01

    # One-time weight preparation (hoisted out of the hot path).
    params = prepare_siglip_mlp_params(w1, b1, w2, b2)

    # 1) weight-resident path (default for weights that fit VMEM).
    out = jax.block_until_ready(siglip_mlp_apply(x, params))
    ref = siglip_mlp_ref(x, w1, b1, w2, b2)
    assert out.shape == (B, S, H)
    assert jnp.allclose(out, ref, atol=1e-3, rtol=1e-3), "mismatch (resident path)"

    # 2) streamed-weight I-reduction path, with row padding (M = 18) and a
    #    multi-step reduction, to exercise the large-weight fallback.
    x_odd = jax.random.normal(kx, (2, 9, H), dtype=jnp.float32)
    out2 = jax.block_until_ready(
        siglip_mlp_apply(x_odd, params, tm=8, ti=128, weights_resident=False))
    ref2 = siglip_mlp_ref(x_odd, w1, b1, w2, b2)
    assert out2.shape == (2, 9, H)
    assert jnp.allclose(out2, ref2, atol=1e-3, rtol=1e-3), "mismatch (streamed path)"

    print("KERNEL_OK")
</pallas_src>

<mosaic_0001>
module attributes {stable_mosaic.version = 11 : i64} {
  func.func @_mlp_resident_kernel(%arg0: i32, %arg1: memref<8x32xf32, #tpu.memory_space<vmem>>, %arg2: memref<32x256xf32, #tpu.memory_space<vmem>>, %arg3: memref<1x256xf32, #tpu.memory_space<vmem>>, %arg4: memref<256x32xf32, #tpu.memory_space<vmem>>, %arg5: memref<1x32xf32, #tpu.memory_space<vmem>>, %arg6: memref<8x32xf32, #tpu.memory_space<vmem>>) attributes {dimension_semantics = [#tpu.dimension_semantics<parallel>], iteration_bounds = array<i64: 2>, scalar_prefetch = 0 : i64, scratch_operands = 0 : i64, tpu.core_type = #tpu.core_type<tc>, window_params = [{transform_indices = @transform_0, window_bounds = array<i64: 8, 32>}, {pipeline_mode = #tpu.pipeline_mode<synchronous>, transform_indices = @transform_1, window_bounds = array<i64: 32, 256>}, {pipeline_mode = #tpu.pipeline_mode<synchronous>, transform_indices = @transform_2, window_bounds = array<i64: 1, 256>}, {pipeline_mode = #tpu.pipeline_mode<synchronous>, transform_indices = @transform_3, window_bounds = array<i64: 256, 32>}, {pipeline_mode = #tpu.pipeline_mode<synchronous>, transform_indices = @transform_4, window_bounds = array<i64: 1, 32>}, {transform_indices = @transform_5, window_bounds = array<i64: 8, 32>}]} {
    %c0 = arith.constant 0 : index
    %c0_0 = arith.constant 0 : index
    %0 = vector.load %arg1[%c0, %c0_0] : memref<8x32xf32, #tpu.memory_space<vmem>>, vector<8x32xf32>
    %c0_1 = arith.constant 0 : index
    %c0_2 = arith.constant 0 : index
    %1 = vector.load %arg2[%c0_1, %c0_2] : memref<32x256xf32, #tpu.memory_space<vmem>>, vector<32x256xf32>
    %cst = arith.constant dense<0.000000e+00> : vector<8x256xf32>
    %2 = tpu.matmul %0, %1, %cst {dimension_numbers = #tpu.dot_dimension_numbers<[1], [0], [0], [1], [0, 0, 1, 1], [], []>} : vector<8x32xf32>, vector<32x256xf32>, vector<8x256xf32> -> vector<8x256xf32>
    %c0_3 = arith.constant 0 : index
    %c0_4 = arith.constant 0 : index
    %3 = vector.load %arg3[%c0_3, %c0_4] : memref<1x256xf32, #tpu.memory_space<vmem>>, vector<1x256xf32>
    %4 = vector.broadcast %3 : vector<1x256xf32> to vector<8x256xf32>
    %5 = arith.addf %2, %4 : vector<8x256xf32>
    %cst_5 = arith.constant 5.000000e-01 : f32
    %6 = vector.broadcast %cst_5 : f32 to vector<8x256xf32>
    %7 = arith.mulf %6, %5 : vector<8x256xf32>
    %cst_6 = arith.constant 0.707106769 : f32
    %8 = vector.broadcast %cst_6 : f32 to vector<8x256xf32>
    %9 = arith.mulf %5, %8 : vector<8x256xf32>
    %10 = math.erf %9 : vector<8x256xf32>
    %cst_7 = arith.constant 1.000000e+00 : f32
    %11 = vector.broadcast %cst_7 : f32 to vector<8x256xf32>
    %12 = arith.addf %11, %10 : vector<8x256xf32>
    %13 = arith.mulf %7, %12 : vector<8x256xf32>
    %c0_8 = arith.constant 0 : index
    %c0_9 = arith.constant 0 : index
    %14 = vector.load %arg4[%c0_8, %c0_9] : memref<256x32xf32, #tpu.memory_space<vmem>>, vector<256x32xf32>
    %cst_10 = arith.constant dense<0.000000e+00> : vector<8x32xf32>
    %15 = tpu.matmul %13, %14, %cst_10 {dimension_numbers = #tpu.dot_dimension_numbers<[1], [0], [0], [1], [0, 0, 1, 1], [], []>} : vector<8x256xf32>, vector<256x32xf32>, vector<8x32xf32> -> vector<8x32xf32>
    %c0_11 = arith.constant 0 : index
    %c0_12 = arith.constant 0 : index
    %16 = vector.load %arg5[%c0_11, %c0_12] : memref<1x32xf32, #tpu.memory_space<vmem>>, vector<1x32xf32>
    %17 = vector.broadcast %16 : vector<1x32xf32> to vector<8x32xf32>
    %18 = arith.addf %15, %17 : vector<8x32xf32>
    %c0_13 = arith.constant 0 : index
    %c0_14 = arith.constant 0 : index
    %19 = vector.load %arg6[%c0_13, %c0_14] : memref<8x32xf32, #tpu.memory_space<vmem>>, vector<8x32xf32>
    tpu.vector_store %arg6[%c0_13, %c0_14], %18 {strides = array<i32>} : memref<8x32xf32, #tpu.memory_space<vmem>>, vector<8x32xf32>,
    return
  }
  func.func @transform_0(%arg0: i32) -> (i32, i32) {
    %c0_i32 = arith.constant 0 : i32
    %c0_i32_0 = arith.constant 0 : i32
    return %arg0, %c0_i32 : i32, i32
  }
  func.func @transform_1(%arg0: i32) -> (i32, i32) {
    %c0_i32 = arith.constant 0 : i32
    %c0_i32_0 = arith.constant 0 : i32
    %c0_i32_1 = arith.constant 0 : i32
    return %c0_i32, %c0_i32_0 : i32, i32
  }
  func.func @transform_2(%arg0: i32) -> (i32, i32) {
    %c0_i32 = arith.constant 0 : i32
    %c0_i32_0 = arith.constant 0 : i32
    %c0_i32_1 = arith.constant 0 : i32
    return %c0_i32, %c0_i32_0 : i32, i32
  }
  func.func @transform_3(%arg0: i32) -> (i32, i32) {
    %c0_i32 = arith.constant 0 : i32
    %c0_i32_0 = arith.constant 0 : i32
    %c0_i32_1 = arith.constant 0 : i32
    return %c0_i32, %c0_i32_0 : i32, i32
  }
  func.func @transform_4(%arg0: i32) -> (i32, i32) {
    %c0_i32 = arith.constant 0 : i32
    %c0_i32_0 = arith.constant 0 : i32
    %c0_i32_1 = arith.constant 0 : i32
    return %c0_i32, %c0_i32_0 : i32, i32
  }
  func.func @transform_5(%arg0: i32) -> (i32, i32) {
    %c0_i32 = arith.constant 0 : i32
    %c0_i32_0 = arith.constant 0 : i32
    return %arg0, %c0_i32 : i32, i32
  }
}

module attributes {stable_mosaic.version = 11 : i64} {
  func.func @_mlp_resident_kernel(%arg0: i32, %arg1: memref<8x32xf32, #tpu.memory_space<vmem>>, %arg2: memref<32x256xf32, #tpu.memory_space<vmem>>, %arg3: memref<1x256xf32, #tpu.memory_space<vmem>>, %arg4: memref<256x32xf32, #tpu.memory_space<vmem>>, %arg5: memref<1x32xf32, #tpu.memory_space<vmem>>, %arg6: memref<8x32xf32, #tpu.memory_space<vmem>>) attributes {dimension_semantics = [#tpu.dimension_semantics<parallel>], iteration_bounds = array<i64: 2>, scalar_prefetch = 0 : i64, scratch_operands = 0 : i64, tpu.core_type = #tpu.core_type<tc>, window_params = [{transform_indices = @transform_0, window_bounds = array<i64: 8, 32>}, {pipeline_mode = #tpu.pipeline_mode<synchronous>, transform_indices = @transform_1, window_bounds = array<i64: 32, 256>}, {pipeline_mode = #tpu.pipeline_mode<synchronous>, transform_indices = @transform_2, window_bounds = array<i64: 1, 256>}, {pipeline_mode = #tpu.pipeline_mode<synchronous>, transform_indices = @transform_3, window_bounds = array<i64: 256, 32>}, {pipeline_mode = #tpu.pipeline_mode<synchronous>, transform_indices = @transform_4, window_bounds = array<i64: 1, 32>}, {transform_indices = @transform_5, window_bounds = array<i64: 8, 32>}]} {
    %c0 = arith.constant 0 : index
    %c0_0 = arith.constant 0 : index
    %0 = vector.load %arg1[%c0, %c0_0] : memref<8x32xf32, #tpu.memory_space<vmem>>, vector<8x32xf32>
    %c0_1 = arith.constant 0 : index
    %c0_2 = arith.constant 0 : index
    %1 = vector.load %arg2[%c0_1, %c0_2] : memref<32x256xf32, #tpu.memory_space<vmem>>, vector<32x256xf32>
    %cst = arith.constant dense<0.000000e+00> : vector<8x256xf32>
    %2 = tpu.matmul %0, %1, %cst {dimension_numbers = #tpu.dot_dimension_numbers<[1], [0], [0], [1], [0, 0, 1, 1], [], []>} : vector<8x32xf32>, vector<32x256xf32>, vector<8x256xf32> -> vector<8x256xf32>
    %c0_3 = arith.constant 0 : index
    %c0_4 = arith.constant 0 : index
    %3 = vector.load %arg3[%c0_3, %c0_4] : memref<1x256xf32, #tpu.memory_space<vmem>>, vector<1x256xf32>
    %4 = vector.broadcast %3 : vector<1x256xf32> to vector<8x256xf32>
    %5 = arith.addf %2, %4 : vector<8x256xf32>
    %cst_5 = arith.constant 5.000000e-01 : f32
    %6 = vector.broadcast %cst_5 : f32 to vector<8x256xf32>
    %7 = arith.mulf %6, %5 : vector<8x256xf32>
    %cst_6 = arith.constant 0.707106769 : f32
    %8 = vector.broadcast %cst_6 : f32 to vector<8x256xf32>
    %9 = arith.mulf %5, %8 : vector<8x256xf32>
    %10 = math.erf %9 : vector<8x256xf32>
    %cst_7 = arith.constant 1.000000e+00 : f32
    %11 = vector.broadcast %cst_7 : f32 to vector<8x256xf32>
    %12 = arith.addf %11, %10 : vector<8x256xf32>
    %13 = arith.mulf %7, %12 : vector<8x256xf32>
    %c0_8 = arith.constant 0 : index
    %c0_9 = arith.constant 0 : index
    %14 = vector.load %arg4[%c0_8, %c0_9] : memref<256x32xf32, #tpu.memory_space<vmem>>, vector<256x32xf32>
    %cst_10 = arith.constant dense<0.000000e+00> : vector<8x32xf32>
    %15 = tpu.matmul %13, %14, %cst_10 {dimension_numbers = #tpu.dot_dimension_numbers<[1], [0], [0], [1], [0, 0, 1, 1], [], []>} : vector<8x256xf32>, vector<256x32xf32>, vector<8x32xf32> -> vector<8x32xf32>
    %c0_11 = arith.constant 0 : index
    %c0_12 = arith.constant 0 : index
    %16 = vector.load %arg5[%c0_11, %c0_12] : memref<1x32xf32, #tpu.memory_space<vmem>>, vector<1x32xf32>
    %17 = vector.broadcast %16 : vector<1x32xf32> to vector<8x32xf32>
    %18 = arith.addf %15, %17 : vector<8x32xf32>
    %c0_13 = arith.constant 0 : index
    %c0_14 = arith.constant 0 : index
    %19 = vector.load %arg6[%c0_13, %c0_14] : memref<8x32xf32, #tpu.memory_space<vmem>>, vector<8x32xf32>
    tpu.vector_store %arg6[%c0_13, %c0_14], %18 {strides = array<i32>} : memref<8x32xf32, #tpu.memory_space<vmem>>, vector<8x32xf32>,
    return
  }
  func.func @transform_0(%arg0: i32) -> (i32, i32) {
    %c0_i32 = arith.constant 0 : i32
    %c0_i32_0 = arith.constant 0 : i32
    return %arg0, %c0_i32 : i32, i32
  }
  func.func @transform_1(%arg0: i32) -> (i32, i32) {
    %c0_i32 = arith.constant 0 : i32
    %c0_i32_0 = arith.constant 0 : i32
    %c0_i32_1 = arith.constant 0 : i32
    return %c0_i32, %c0_i32_0 : i32, i32
  }
  func.func @transform_2(%arg0: i32) -> (i32, i32) {
    %c0_i32 = arith.constant 0 : i32
    %c0_i32_0 = arith.constant 0 : i32
    %c0_i32_1 = arith.constant 0 : i32
    return %c0_i32, %c0_i32_0 : i32, i32
  }
  func.func @transform_3(%arg0: i32) -> (i32, i32) {
    %c0_i32 = arith.constant 0 : i32
    %c0_i32_0 = arith.constant 0 : i32
    %c0_i32_1 = arith.constant 0 : i32
    return %c0_i32, %c0_i32_0 : i32, i32
  }
  func.func @transform_4(%arg0: i32) -> (i32, i32) {
    %c0_i32 = arith.constant 0 : i32
    %c0_i32_0 = arith.constant 0 : i32
    %c0_i32_1 = arith.constant 0 : i32
    return %c0_i32, %c0_i32_0 : i32, i32
  }
  func.func @transform_5(%arg0: i32) -> (i32, i32) {
    %c0_i32 = arith.constant 0 : i32
    %c0_i32_0 = arith.constant 0 : i32
    return %arg0, %c0_i32 : i32, i32
  }
}

</mosaic_0001>

<llo_original>
// kernel: tpu_custom_call.1
$region0: #{tpu_custom_call.1}
  #allocation0 [shape = 'u32[]', space=smem, size = 0x4, offset = 0x4, fixed_abs, tag = 'smem constant byte address 0x4 - core index']
  #allocation1 [shape = 'u32[144,128]{1,0:T(1,128)}', space=vmem, size = 0x12000, scoped, tag = 'internal scratch']
  %s0 = inlined_call_operand.vmem [shape: f32[16,32], index: 0, kind: input, shape index: {}]
  %s1 = inlined_call_operand.vmem [shape: f32[32,256], index: 1, kind: input, shape index: {}]
  %s2 = inlined_call_operand.vmem [shape: f32[1,256], index: 2, kind: input, shape index: {}]
  %s3 = inlined_call_operand.vmem [shape: f32[256,32], index: 3, kind: input, shape index: {}]
  %s4 = inlined_call_operand.vmem [shape: f32[1,32], index: 4, kind: input, shape index: {}]
  %s5 = inlined_call_operand.hbm [shape: f32[16,32], index: 5, kind: output, shape index: {}]
  %s6 = sld [smem:[#allocation0]]
  $region53: #{tpu_custom_call.1} parent=0
    _
  %s8 = ssub.s32 1, %s6
  %s9 = scalar_select 0, %s8, %s6
  $region1: #{tpu_custom_call.1} parent=0
    #allocation2 [shape = 'u8[8192]{0}', space=vmem, size = 0x2000, scoped, tag = 'output window, operand 0']
    #allocation3 [shape = 's32[2]{0}', space=sflag, size = 0x8, scoped, tag = 'scoped memory for tpu_custom_call.1']
    %10 = vsyncpa [#allocation3], 0
    %s11 = scalar_lea.sflag [#allocation3], 1
    %12 = vsyncpa %s11, 0
    loop: start=0, step=1, limit=4
    $region2: #{tpu_custom_call.1} parent=1 // loop_pre_header
      _
    $region3: #{tpu_custom_call.1} parent=1 // loop_header
      %s14 = sphi 0, %s18
      %p15 = scmp.ge.s32.totalorder %s14, 4
      %s24 = sphi 0, %s26
      %s27 = sphi 0, %s24
      %s28 = sphi 0, %s27
      %s44 = sphi 0, %s28
      %s48 = sphi 0, %s48
      %s50 = sphi 0, %s48
      %s51 = sphi 0, %s50
      %s65 = sphi 0, %s51
      %s69 = sphi 0, %s69
      %s71 = sphi 0, %s69
      %s72 = sphi 0, %s71
      %s86 = sphi 0, %s72
      %s90 = sphi 0, %s90
      %s92 = sphi 0, %s90
      %s93 = sphi 0, %s92
      %s107 = sphi 0, %s93
      %s111 = sphi 0, %s111
      %s113 = sphi 0, %s111
      %s114 = sphi 0, %s113
      %s128 = sphi 0, %s114
      %s134 = sphi 0, %s136
      %s137 = sphi 0, %s134
      %s138 = sphi 0, %s137
      %s154 = sphi 0, %s138
    $region4: #{tpu_custom_call.1} parent=1 // loop_header_branch
      %17 = sbr.rel (%p15) target = $region8
    $region5: #{tpu_custom_call.1} parent=1 // loop_body
      %s19 = ssub.s32 %s14, 1
      %s20 = ssub.s32 %s14, 2
      %s21 = sadd.s32 %s14, 1
      %s22 = ssub.s32 %s14, %s21
      %p23 = scmp.eq.s32.totalorder %s22, 0
      %s25 = sadd.s32 %s24, 1
      %s26 = scalar_select %p23, %s24, %s25
      %p29 = pneg %p23
      %p30 = scmp.eq.s32.totalorder %s14, 1
      %p31 = por %p29, %p30
      %p32 = scmp.ne.s32.totalorder %s24, %s27
      %p33 = scmp.eq.s32.totalorder %s14, 0
      %p34 = por %p32, %p33
      %p35 = scmp.ne.s32.totalorder %s24, %s27
      %p36 = scmp.eq.s32.totalorder %s19, 1
      %p37 = por %p35, %p36
      %p38 = scmp.ne.s32.totalorder %s27, %s28
      %p39 = scmp.eq.s32.totalorder %s19, 0
      %p40 = por %p38, %p39
      %p41 = scmp.ne.s32.totalorder %s27, %s28
      %p42 = scmp.eq.s32.totalorder %s20, 1
      %p43 = por %p41, %p42
      %p45 = scmp.ne.s32.totalorder %s28, %s44
      %p46 = scmp.eq.s32.totalorder %s20, 0
      %p47 = por %p45, %p46
      %s49 = sadd.s32 %s48, 1
      %p52 = scmp.eq.s32.totalorder %s14, 1
      %p53 = scmp.ne.s32.totalorder %s48, %s50
      %p54 = scmp.eq.s32.totalorder %s14, 0
      %p55 = por %p53, %p54
      %p56 = scmp.ne.s32.totalorder %s48, %s50
      %p57 = scmp.eq.s32.totalorder %s19, 1
      %p58 = por %p56, %p57
      %p59 = scmp.ne.s32.totalorder %s50, %s51
      %p60 = scmp.eq.s32.totalorder %s19, 0
      %p61 = por %p59, %p60
      %p62 = scmp.ne.s32.totalorder %s50, %s51
      %p63 = scmp.eq.s32.totalorder %s20, 1
      %p64 = por %p62, %p63
      %p66 = scmp.ne.s32.totalorder %s51, %s65
      %p67 = scmp.eq.s32.totalorder %s20, 0
      %p68 = por %p66, %p67
      %s70 = sadd.s32 %s69, 1
      %p73 = scmp.eq.s32.totalorder %s14, 1
      %p74 = scmp.ne.s32.totalorder %s69, %s71
      %p75 = scmp.eq.s32.totalorder %s14, 0
      %p76 = por %p74, %p75
      %p77 = scmp.ne.s32.totalorder %s69, %s71
      %p78 = scmp.eq.s32.totalorder %s19, 1
      %p79 = por %p77, %p78
      %p80 = scmp.ne.s32.totalorder %s71, %s72
      %p81 = scmp.eq.s32.totalorder %s19, 0
      %p82 = por %p80, %p81
      %p83 = scmp.ne.s32.totalorder %s71, %s72
      %p84 = scmp.eq.s32.totalorder %s20, 1
      %p85 = por %p83, %p84
      %p87 = scmp.ne.s32.totalorder %s72, %s86
      %p88 = scmp.eq.s32.totalorder %s20, 0
      %p89 = por %p87, %p88
      %s91 = sadd.s32 %s90, 1
      %p94 = scmp.eq.s32.totalorder %s14, 1
      %p95 = scmp.ne.s32.totalorder %s90, %s92
      %p96 = scmp.eq.s32.totalorder %s14, 0
      %p97 = por %p95, %p96
      %p98 = scmp.ne.s32.totalorder %s90, %s92
      %p99 = scmp.eq.s32.totalorder %s19, 1
      %p100 = por %p98, %p99
      %p101 = scmp.ne.s32.totalorder %s92, %s93
      %p102 = scmp.eq.s32.totalorder %s19, 0
      %p103 = por %p101, %p102
      %p104 = scmp.ne.s32.totalorder %s92, %s93
      %p105 = scmp.eq.s32.totalorder %s20, 1
      %p106 = por %p104, %p105
      %p108 = scmp.ne.s32.totalorder %s93, %s107
      %p109 = scmp.eq.s32.totalorder %s20, 0
      %p110 = por %p108, %p109
      %s112 = sadd.s32 %s111, 1
      %p115 = scmp.eq.s32.totalorder %s14, 1
      %p116 = scmp.ne.s32.totalorder %s111, %s113
      %p117 = scmp.eq.s32.totalorder %s14, 0
      %p118 = por %p116, %p117
      %p119 = scmp.ne.s32.totalorder %s111, %s113
      %p120 = scmp.eq.s32.totalorder %s19, 1
      %p121 = por %p119, %p120
      %p122 = scmp.ne.s32.totalorder %s113, %s114
      %p123 = scmp.eq.s32.totalorder %s19, 0
      %p124 = por %p122, %p123
      %p125 = scmp.ne.s32.totalorder %s113, %s114
      %p126 = scmp.eq.s32.totalorder %s20, 1
      %p127 = por %p125, %p126
      %p129 = scmp.ne.s32.totalorder %s114, %s128
      %p130 = scmp.eq.s32.totalorder %s20, 0
      %p131 = por %p129, %p130
      %s132 = ssub.s32 %s14, %s21
      %p133 = scmp.eq.s32.totalorder %s132, 0
      %s135 = sadd.s32 %s134, 1
      %s136 = scalar_select %p133, %s134, %s135
      %p139 = pneg %p133
      %p140 = scmp.eq.s32.totalorder %s14, 1
      %p141 = por %p139, %p140
      %p142 = scmp.ne.s32.totalorder %s134, %s137
      %p143 = scmp.eq.s32.totalorder %s14, 0
      %p144 = por %p142, %p143
      %p145 = scmp.ne.s32.totalorder %s134, %s137
      %p146 = scmp.eq.s32.totalorder %s19, 1
      %p147 = por %p145, %p146
      %p148 = scmp.ne.s32.totalorder %s137, %s138
      %p149 = scmp.eq.s32.totalorder %s19, 0
      %p150 = por %p148, %p149
      %p151 = scmp.ne.s32.totalorder %s137, %s138
      %p152 = scmp.eq.s32.totalorder %s20, 1
      %p153 = por %p151, %p152
      %p155 = scmp.ne.s32.totalorder %s138, %s154
      %p156 = scmp.eq.s32.totalorder %s20, 0
      %p157 = por %p155, %p156
      %p158 = scmp.le.s32.totalorder 1, %s14
      %p159 = scmp.lt.s32.totalorder %s14, 3
      %p160 = pnand %p158, %p159
      %p161 = pneg %p160
      // Predicated region
      $region9: #{tpu_custom_call.1} parent=5 // pred_check
        _
      $region10: #{tpu_custom_call.1} parent=5 // pred_check_branch
        %163 = sbr.rel (%p160) target = $region12
      $region11: #{tpu_custom_call.1} parent=5 // pred_region
        %s164 = ssub.s32 %s14, 1
        // Predicated region
        $region13: #{tpu_custom_call.1} parent=11 // pred_check
          %p165 = pneg %p61
        $region14: #{tpu_custom_call.1} parent=11 // pred_check_branch
          %167 = sbr.rel (%p165) target = $region16
        $region15: #{tpu_custom_call.1} parent=11 // pred_region
          _
        $region16: #{tpu_custom_call.1} parent=11 // pred_fallthru
          _
        // Predicated region
        $region17: #{tpu_custom_call.1} parent=11 // pred_check
          %p168 = pneg %p82
        $region18: #{tpu_custom_call.1} parent=11 // pred_check_branch
          %170 = sbr.rel (%p168) target = $region20
        $region19: #{tpu_custom_call.1} parent=11 // pred_region
          _
        $region20: #{tpu_custom_call.1} parent=11 // pred_fallthru
          _
        // Predicated region
        $region21: #{tpu_custom_call.1} parent=11 // pred_check
          %p171 = pneg %p103
        $region22: #{tpu_custom_call.1} parent=11 // pred_check_branch
          %173 = sbr.rel (%p171) target = $region24
        $region23: #{tpu_custom_call.1} parent=11 // pred_region
          _
        $region24: #{tpu_custom_call.1} parent=11 // pred_fallthru
          _
        // Predicated region
        $region25: #{tpu_custom_call.1} parent=11 // pred_check
          %p174 = pneg %p124
        $region26: #{tpu_custom_call.1} parent=11 // pred_check_branch
          %176 = sbr.rel (%p174) target = $region28
        $region27: #{tpu_custom_call.1} parent=11 // pred_region
          _
        $region28: #{tpu_custom_call.1} parent=11 // pred_fallthru
          _
      $region12: #{tpu_custom_call.1} parent=5 // pred_fallthru
        _
      %p177 = scmp.lt.s32.totalorder %s14, 2
      // Predicated region
      $region29: #{tpu_custom_call.1} parent=5 // pred_check
        %p178 = pneg %p177
      $region30: #{tpu_custom_call.1} parent=5 // pred_check_branch
        %180 = sbr.rel (%p178) target = $region32
      $region31: #{tpu_custom_call.1} parent=5 // pred_region
        // Predicated region
        $region33: #{tpu_custom_call.1} parent=31 // pred_check
          %p181 = pneg %p34
        $region34: #{tpu_custom_call.1} parent=31 // pred_check_branch
          %183 = sbr.rel (%p181) target = $region36
        $region35: #{tpu_custom_call.1} parent=31 // pred_region
          %p184 = scmp.lt.s32.totalorder %s14, 1
          %s185 = scalar_select %p184, %s14, 1
          %s186 = smul.addr %s185, 8
          %s187 = scalar_lea.vmem %s0, %s186
        $region36: #{tpu_custom_call.1} parent=31 // pred_fallthru
          _
      $region32: #{tpu_custom_call.1} parent=5 // pred_fallthru
        _
      %p188 = scmp.le.s32.totalorder 1, %s14
      %p189 = scmp.lt.s32.totalorder %s14, 3
      %p190 = pnand %p188, %p189
      %p191 = pneg %p190
      // Predicated region
      $region37: #{tpu_custom_call.1} parent=5 // pred_check
        _
      $region38: #{tpu_custom_call.1} parent=5 // pred_check_branch
        %193 = sbr.rel (%p190) target = $region40
      $region39: #{tpu_custom_call.1} parent=5 // pred_region
        %s194 = ssub.s32 %s14, 1
        %p195 = scmp.lt.s32.totalorder %s19, 1
        %s196 = scalar_select %p195, %s19, 1
        %s197 = smul.addr %s196, 8
        %s198 = scalar_lea.vmem %s0, %s197
        %p199 = pneg %p40
        %p200 = pneg %p37
        %p201 = pneg %p61
        %p202 = pneg %p58
        %p203 = pneg %p82
        %p204 = pneg %p79
        %p205 = pneg %p103
        %p206 = pneg %p100
        %p207 = pneg %p124
        %p208 = pneg %p121
        %p209 = pneg %p150
        %p210 = pneg %p147
        %s211 = sand.u32 %s137, 1
        %s212 = scalar_lea.sflag [#allocation3], %s211
        %s213 = sand.u32 %s137, 1
        %s214 = smul.addr %s213, 8
        %s215 = scalar_lea.vmem [#allocation2], %s214
        %p216 = scmp.lt.s32.totalorder %s19, 1
        %s217 = scalar_select %p216, %s19, 1
        %s218 = smul.addr %s217, 8
        %s219 = scalar_lea.vmem %s0, %s218
        %v220 = vld [vmem:[%s219] sm:$0xff]
        %v221 = vld [vmem:[%s1] sm:$0xff]
        %v222 = vld [vmem:[%s1 + $0x8] sm:$0xff]
        %v223 = vld [vmem:[%s1 + $0x10] sm:$0xff]
        %v224 = vld [vmem:[%s1 + $0x18] sm:$0xff]
        %v225 = vld [vmem:[%s1 + $0x20] sm:$0xff]
        %v226 = vld [vmem:[%s1 + $0x28] sm:$0xff]
        %v227 = vld [vmem:[%s1 + $0x30] sm:$0xff]
        %v228 = vld [vmem:[%s1 + $0x38] sm:$0xff]
        %v229 = vld [vmem:[%s2] sm:$0x3]
        %v231 = vlaneseq
        %v232 = vshrl.u32 %v231, 7
        %v233 = vsub.s32 0, %v232
        %v234 = vrot.slane %v229, %v233
        %v235 = vlaneseq
        %v236 = vshrl.u32 %v235, 7
        %v237 = vsub.s32 1, %v236
        %v238 = vrot.slane %v229, %v237
        %vm241 = vcmask 261120
        %v243 = vsel %vm241, %v220, 0
        %245 = vmatprep.subr.mxu0 %v222
        %246 = vmatpush1.msra.mxu0 %v221
        %247 = vmatprep.subr.mxu0 %v224
        %248 = vmatpush1.msra.mxu0 %v223
        %249 = vmatprep.subr.mxu0 %v226
        %250 = vmatpush1.msra.mxu0 %v225
        %251 = vmatprep.subr.mxu0 %v228
        %252 = vmatpush1.msra.mxu0 %v227
        %253 = vmatprep.subr.mxu0 0.0
        %254 = vmatpush1.msra.mxu0 0.0
        %255 = vmatprep.subr.mxu0 0.0
        %256 = vmatpush1.msra.mxu0 0.0
        %257 = vmatprep.subr.mxu0 0.0
        %258 = vmatpush1.msra.mxu0 0.0
        %259 = vmatprep.subr.mxu0 0.0
        %260 = vmatpush1.msra.mxu0 0.0
        %261 = vmatprep.subr.mxu0 0.0
        %262 = vmatpush1.msra.mxu0 0.0
        %263 = vmatprep.subr.mxu0 0.0
        %264 = vmatpush1.msra.mxu0 0.0
        %265 = vmatprep.subr.mxu0 0.0
        %266 = vmatpush1.msra.mxu0 0.0
        %267 = vmatprep.subr.mxu0 0.0
        %268 = vmatpush1.msra.mxu0 0.0
        %269 = vmatprep.subr.mxu0 0.0
        %270 = vmatpush1.msra.mxu0 0.0
        %271 = vmatprep.subr.mxu0 0.0
        %272 = vmatpush1.msra.mxu0 0.0
        %273 = vmatprep.subr.mxu0 0.0
        %274 = vmatpush1.msra.mxu0 0.0
        %275 = vmatprep.subr.mxu0 0.0
        %276 = vmatpush1.msra.mxu0 0.0
        %277 = vmatprep.subr.mxu0 0.0
        %278 = vmatpush1.msra.mxu0 0.0
        %279 = vmatprep.subr.mxu0 0.0
        %280 = vmatpush1.msra.mxu0 0.0
        %281 = vmatprep.subr.mxu0 0.0
        %282 = vmatpush1.msra.mxu0 0.0
        %283 = vmatprep.subr.mxu0 0.0
        %284 = vmatpush1.msra.mxu0 0.0
        %285 = vmatprep.subr.mxu0 0.0
        %286 = vmatpush1.msra.mxu0 0.0
        %287 = vmatprep.subr.mxu0 0.0
        %288 = vmatpush1.msra.mxu0 0.0
        %289 = vmatprep.subr.mxu0 0.0
        %290 = vmatpush1.msra.mxu0 0.0
        %291 = vmatprep.subr.mxu0 0.0
        %292 = vmatpush1.msra.mxu0 0.0
        %293 = vmatprep.subr.mxu0 0.0
        %294 = vmatpush1.msra.mxu0 0.0
        %295 = vmatprep.subr.mxu0 0.0
        %296 = vmatpush1.msra.mxu0 0.0
        %297 = vmatprep.subr.mxu0 0.0
        %298 = vmatpush1.msra.mxu0 0.0
        %299 = vmatprep.subr.mxu0 0.0
        %300 = vmatpush1.msra.mxu0 0.0
        %301 = vmatprep.subr.mxu0 0.0
        %302 = vmatpush1.msra.mxu0 0.0
        %303 = vmatprep.subr.mxu0 0.0
        %304 = vmatpush1.msra.mxu0 0.0
        %305 = vmatprep.subr.mxu0 0.0
        %306 = vmatpush1.msra.mxu0 0.0
        %307 = vmatprep.subr.mxu0 0.0
        %308 = vmatpush1.msra.mxu0 0.0
        %309 = vmatprep.mubr.f32.mxu0 0.0
        %310 = vmatmul.mubr.f32.gmra.mrb[0].mxu0 %v243
        %v311 = vpop.f32.mrb[0].mxu0
        %v312 = vadd.f32 %v234, %v311
        %v313 = vpop.f32.mrb[0].mxu0
        %v314 = vadd.f32 %v238, %v313
        %315 = vdwg.mxu0
        %v316 = vmul.f32 %v312, 0.5
        %v317 = vmul.f32 %v314, 0.5
        %v318 = vmul.f32 %v312, 0.70710677
        %v319 = vmul.f32 %v314, 0.70710677
        %v320 = verf.f32.pop %v318
        %v321 = verf.f32.pop %v319
        %v322 = vadd.f32 %v320, 1.0
        %v323 = vadd.f32 %v321, 1.0
        %v324 = vmul.f32 %v316, %v322
        %v325 = vmul.f32 %v317, %v323
        %v326 = vld [vmem:[%s3] sm:$0xff]
        %v327 = vld [vmem:[%s3 + $0x8] sm:$0xff]
        %v328 = vld [vmem:[%s3 + $0x10] sm:$0xff]
        %v329 = vld [vmem:[%s3 + $0x18] sm:$0xff]
        %v330 = vld [vmem:[%s3 + $0x20] sm:$0xff]
        %v331 = vld [vmem:[%s3 + $0x28] sm:$0xff]
        %v332 = vld [vmem:[%s3 + $0x30] sm:$0xff]
        %v333 = vld [vmem:[%s3 + $0x38] sm:$0xff]
        %v334 = vld [vmem:[%s3 + $0x40] sm:$0xff]
        %v335 = vld [vmem:[%s3 + $0x48] sm:$0xff]
        %v336 = vld [vmem:[%s3 + $0x50] sm:$0xff]
        %v337 = vld [vmem:[%s3 + $0x58] sm:$0xff]
        %v338 = vld [vmem:[%s3 + $0x60] sm:$0xff]
        %v339 = vld [vmem:[%s3 + $0x68] sm:$0xff]
        %v340 = vld [vmem:[%s3 + $0x70] sm:$0xff]
        %v341 = vld [vmem:[%s3 + $0x78] sm:$0xff]
        %v342 = vld [vmem:[%s3 + $0x80] sm:$0xff]
        %v343 = vld [vmem:[%s3 + $0x88] sm:$0xff]
        %v344 = vld [vmem:[%s3 + $0x90] sm:$0xff]
        %v345 = vld [vmem:[%s3 + $0x98] sm:$0xff]
        %v346 = vld [vmem:[%s3 + $0xa0] sm:$0xff]
        %v347 = vld [vmem:[%s3 + $0xa8] sm:$0xff]
        %v348 = vld [vmem:[%s3 + $0xb0] sm:$0xff]
        %v349 = vld [vmem:[%s3 + $0xb8] sm:$0xff]
        %v350 = vld [vmem:[%s3 + $0xc0] sm:$0xff]
        %v351 = vld [vmem:[%s3 + $0xc8] sm:$0xff]
        %v352 = vld [vmem:[%s3 + $0xd0] sm:$0xff]
        %v353 = vld [vmem:[%s3 + $0xd8] sm:$0xff]
        %v354 = vld [vmem:[%s3 + $0xe0] sm:$0xff]
        %v355 = vld [vmem:[%s3 + $0xe8] sm:$0xff]
        %v356 = vld [vmem:[%s3 + $0xf0] sm:$0xff]
        %v357 = vld [vmem:[%s3 + $0xf8] sm:$0xff]
        %v358 = vld [vmem:[%s4] sm:$0x1]
        %v360 = vlaneseq
        %v361 = vshrl.u32 %v360, 7
        %v362 = vsub.s32 0, %v361
        %v363 = vrot.slane %v358, %v362
        %365 = vmatprep.subr.mxu0 0.0
        %366 = vmatpush1.msra.mxu0 %v326
        %367 = vmatprep.subr.mxu0 0.0
        %368 = vmatpush1.msra.mxu0 %v327
        %369 = vmatprep.subr.mxu0 0.0
        %370 = vmatpush1.msra.mxu0 %v328
        %371 = vmatprep.subr.mxu0 0.0
        %372 = vmatpush1.msra.mxu0 %v329
        %373 = vmatprep.subr.mxu0 0.0
        %374 = vmatpush1.msra.mxu0 %v330
        %375 = vmatprep.subr.mxu0 0.0
        %376 = vmatpush1.msra.mxu0 %v331
        %377 = vmatprep.subr.mxu0 0.0
        %378 = vmatpush1.msra.mxu0 %v332
        %379 = vmatprep.subr.mxu0 0.0
        %380 = vmatpush1.msra.mxu0 %v333
        %381 = vmatprep.subr.mxu0 0.0
        %382 = vmatpush1.msra.mxu0 %v334
        %383 = vmatprep.subr.mxu0 0.0
        %384 = vmatpush1.msra.mxu0 %v335
        %385 = vmatprep.subr.mxu0 0.0
        %386 = vmatpush1.msra.mxu0 %v336
        %387 = vmatprep.subr.mxu0 0.0
        %388 = vmatpush1.msra.mxu0 %v337
        %389 = vmatprep.subr.mxu0 0.0
        %390 = vmatpush1.msra.mxu0 %v338
        %391 = vmatprep.subr.mxu0 0.0
        %392 = vmatpush1.msra.mxu0 %v339
        %393 = vmatprep.subr.mxu0 0.0
        %394 = vmatpush1.msra.mxu0 %v340
        %395 = vmatprep.subr.mxu0 0.0
        %396 = vmatpush1.msra.mxu0 %v341
        %397 = vmatprep.subr.mxu0 0.0
        %398 = vmatpush1.msra.mxu0 %v342
        %399 = vmatprep.subr.mxu0 0.0
        %400 = vmatpush1.msra.mxu0 %v343
        %401 = vmatprep.subr.mxu0 0.0
        %402 = vmatpush1.msra.mxu0 %v344
        %403 = vmatprep.subr.mxu0 0.0
        %404 = vmatpush1.msra.mxu0 %v345
        %405 = vmatprep.subr.mxu0 0.0
        %406 = vmatpush1.msra.mxu0 %v346
        %407 = vmatprep.subr.mxu0 0.0
        %408 = vmatpush1.msra.mxu0 %v347
        %409 = vmatprep.subr.mxu0 0.0
        %410 = vmatpush1.msra.mxu0 %v348
        %411 = vmatprep.subr.mxu0 0.0
        %412 = vmatpush1.msra.mxu0 %v349
        %413 = vmatprep.subr.mxu0 0.0
        %414 = vmatpush1.msra.mxu0 %v350
        %415 = vmatprep.subr.mxu0 0.0
        %416 = vmatpush1.msra.mxu0 %v351
        %417 = vmatprep.subr.mxu0 0.0
        %418 = vmatpush1.msra.mxu0 %v352
        %419 = vmatprep.subr.mxu0 0.0
        %420 = vmatpush1.msra.mxu0 %v353
        %421 = vmatprep.subr.mxu0 0.0
        %422 = vmatpush1.msra.mxu0 %v354
        %423 = vmatprep.subr.mxu0 0.0
        %424 = vmatpush1.msra.mxu0 %v355
        %425 = vmatprep.subr.mxu0 0.0
        %426 = vmatpush1.msra.mxu0 %v356
        %427 = vmatprep.subr.mxu0 0.0
        %428 = vmatpush1.msra.mxu0 %v357
        %429 = vmatprep.mubr.f32.mxu0 %v325
        %430 = vmatmul.mubr.f32.gmra.mrb[0].mxu0 %v324
        %v431 = vpop.f32.mrb[0].mxu0
        %v432 = vadd.f32 %v363, %v431
        %v433 = vpop.f32.mrb[0].mxu0
        %434 = vdwg.mxu0
        %435 = vst.msk [vmem:[%s215] sm:$0xff] %vm241, %v432
        %s436 = sand.u32 %s137, 1
        %s437 = scalar_lea.sflag [#allocation3], %s436
        %s438 = sand.u32 %s137, 1
        %s439 = smul.addr %s438, 8
        %s440 = scalar_lea.vmem [#allocation2], %s439
        // Predicated region
        $region41: #{tpu_custom_call.1} parent=39 // pred_check
          %p441 = pneg %p147
        $region42: #{tpu_custom_call.1} parent=39 // pred_check_branch
          %443 = sbr.rel (%p441) target = $region44
        $region43: #{tpu_custom_call.1} parent=39 // pred_region
          %s445 = ssub.s32 128, 128
          %446 = vsyncadd %s437, %s445
          %s447 = smul.addr %s19, 128
          %s448 = scalar_lea.hbm %s5, %s447
          %s450 = sshll.u32 %s440, 4
          %s451 = int_to_ptr.vmem [resolvable:$true] %s450
          %453 = dma.vmem_to_hbm [thread:$0]  %s451, 128, %s448, %s437
        $region44: #{tpu_custom_call.1} parent=39 // pred_fallthru
          _
      $region40: #{tpu_custom_call.1} parent=5 // pred_fallthru
        _
      %p454 = scmp.le.s32.totalorder 2, %s14
      // Predicated region
      $region45: #{tpu_custom_call.1} parent=5 // pred_check
        %p455 = pneg %p454
      $region46: #{tpu_custom_call.1} parent=5 // pred_check_branch
        %457 = sbr.rel (%p455) target = $region48
      $region47: #{tpu_custom_call.1} parent=5 // pred_region
        %s458 = ssub.s32 %s14, 2
        // Predicated region
        $region49: #{tpu_custom_call.1} parent=47 // pred_check
          %p459 = pneg %p153
        $region50: #{tpu_custom_call.1} parent=47 // pred_check_branch
          %461 = sbr.rel (%p459) target = $region52
        $region51: #{tpu_custom_call.1} parent=47 // pred_region
          %s462 = sand.u32 %s138, 1
          %s463 = scalar_lea.sflag [#allocation3], %s462
          %s464 = sand.u32 %s138, 1
          %s465 = smul.addr %s464, 8
          %s466 = scalar_lea.vmem [#allocation2], %s465
          %467 = dma.done %s463, 128
        $region52: #{tpu_custom_call.1} parent=47 // pred_fallthru
          _
      $region48: #{tpu_custom_call.1} parent=5 // pred_fallthru
        _
    $region6: #{tpu_custom_call.1} parent=1 // loop_footer
      %s18 = sadd.s32 1, %s14
    $region7: #{tpu_custom_call.1} parent=1 // loop_footer_branch
      %13 = sbr.rel target = $region3
    $region8: #{tpu_custom_call.1} parent=1 // loop_exit
      _
    %468 = vsyncpa [#allocation3], 1
    %s469 = scalar_lea.sflag [#allocation3], 1
    %470 = vsyncpa %s469, 1

// kernel: tpu_custom_call.1
$region0: #{tpu_custom_call.1}
  #allocation0 [shape = 'u32[]', space=smem, size = 0x4, offset = 0x4, fixed_abs, tag = 'smem constant byte address 0x4 - core index']
  #allocation1 [shape = 'u32[144,128]{1,0:T(1,128)}', space=vmem, size = 0x12000, scoped, tag = 'internal scratch']
  %s0 = inlined_call_operand.vmem [shape: f32[16,32], index: 0, kind: input, shape index: {}]
  %s1 = inlined_call_operand.vmem [shape: f32[32,256], index: 1, kind: input, shape index: {}]
  %s2 = inlined_call_operand.vmem [shape: f32[1,256], index: 2, kind: input, shape index: {}]
  %s3 = inlined_call_operand.vmem [shape: f32[256,32], index: 3, kind: input, shape index: {}]
  %s4 = inlined_call_operand.vmem [shape: f32[1,32], index: 4, kind: input, shape index: {}]
  %s5 = inlined_call_operand.hbm [shape: f32[16,32], index: 5, kind: output, shape index: {}]
  %s6 = sld [smem:[#allocation0]]
  $region53: #{tpu_custom_call.1} parent=0
    _
  %s8 = ssub.s32 1, %s6
  %s9 = scalar_select 0, %s8, %s6
  $region1: #{tpu_custom_call.1} parent=0
    #allocation2 [shape = 'u8[8192]{0}', space=vmem, size = 0x2000, scoped, tag = 'output window, operand 0']
    #allocation3 [shape = 's32[2]{0}', space=sflag, size = 0x8, scoped, tag = 'scoped memory for tpu_custom_call.1']
    %10 = vsyncpa [#allocation3], 0
    %s11 = scalar_lea.sflag [#allocation3], 1
    %12 = vsyncpa %s11, 0
    loop: start=0, step=1, limit=4
    $region2: #{tpu_custom_call.1} parent=1 // loop_pre_header
      _
    $region3: #{tpu_custom_call.1} parent=1 // loop_header
      %s14 = sphi 0, %s18
      %p15 = scmp.ge.s32.totalorder %s14, 4
      %s24 = sphi 0, %s26
      %s27 = sphi 0, %s24
      %s28 = sphi 0, %s27
      %s44 = sphi 0, %s28
      %s48 = sphi 0, %s48
      %s50 = sphi 0, %s48
      %s51 = sphi 0, %s50
      %s65 = sphi 0, %s51
      %s69 = sphi 0, %s69
      %s71 = sphi 0, %s69
      %s72 = sphi 0, %s71
      %s86 = sphi 0, %s72
      %s90 = sphi 0, %s90
      %s92 = sphi 0, %s90
      %s93 = sphi 0, %s92
      %s107 = sphi 0, %s93
      %s111 = sphi 0, %s111
      %s113 = sphi 0, %s111
      %s114 = sphi 0, %s113
      %s128 = sphi 0, %s114
      %s134 = sphi 0, %s136
      %s137 = sphi 0, %s134
      %s138 = sphi 0, %s137
      %s154 = sphi 0, %s138
    $region4: #{tpu_custom_call.1} parent=1 // loop_header_branch
      %17 = sbr.rel (%p15) target = $region8
    $region5: #{tpu_custom_call.1} parent=1 // loop_body
      %s19 = ssub.s32 %s14, 1
      %s20 = ssub.s32 %s14, 2
      %s21 = sadd.s32 %s14, 1
      %s22 = ssub.s32 %s14, %s21
      %p23 = scmp.eq.s32.totalorder %s22, 0
      %s25 = sadd.s32 %s24, 1
      %s26 = scalar_select %p23, %s24, %s25
      %p29 = pneg %p23
      %p30 = scmp.eq.s32.totalorder %s14, 1
      %p31 = por %p29, %p30
      %p32 = scmp.ne.s32.totalorder %s24, %s27
      %p33 = scmp.eq.s32.totalorder %s14, 0
      %p34 = por %p32, %p33
      %p35 = scmp.ne.s32.totalorder %s24, %s27
      %p36 = scmp.eq.s32.totalorder %s19, 1
      %p37 = por %p35, %p36
      %p38 = scmp.ne.s32.totalorder %s27, %s28
      %p39 = scmp.eq.s32.totalorder %s19, 0
      %p40 = por %p38, %p39
      %p41 = scmp.ne.s32.totalorder %s27, %s28
      %p42 = scmp.eq.s32.totalorder %s20, 1
      %p43 = por %p41, %p42
      %p45 = scmp.ne.s32.totalorder %s28, %s44
      %p46 = scmp.eq.s32.totalorder %s20, 0
      %p47 = por %p45, %p46
      %s49 = sadd.s32 %s48, 1
      %p52 = scmp.eq.s32.totalorder %s14, 1
      %p53 = scmp.ne.s32.totalorder %s48, %s50
      %p54 = scmp.eq.s32.totalorder %s14, 0
      %p55 = por %p53, %p54
      %p56 = scmp.ne.s32.totalorder %s48, %s50
      %p57 = scmp.eq.s32.totalorder %s19, 1
      %p58 = por %p56, %p57
      %p59 = scmp.ne.s32.totalorder %s50, %s51
      %p60 = scmp.eq.s32.totalorder %s19, 0
      %p61 = por %p59, %p60
      %p62 = scmp.ne.s32.totalorder %s50, %s51
      %p63 = scmp.eq.s32.totalorder %s20, 1
      %p64 = por %p62, %p63
      %p66 = scmp.ne.s32.totalorder %s51, %s65
      %p67 = scmp.eq.s32.totalorder %s20, 0
      %p68 = por %p66, %p67
      %s70 = sadd.s32 %s69, 1
      %p73 = scmp.eq.s32.totalorder %s14, 1
      %p74 = scmp.ne.s32.totalorder %s69, %s71
      %p75 = scmp.eq.s32.totalorder %s14, 0
      %p76 = por %p74, %p75
      %p77 = scmp.ne.s32.totalorder %s69, %s71
      %p78 = scmp.eq.s32.totalorder %s19, 1
      %p79 = por %p77, %p78
      %p80 = scmp.ne.s32.totalorder %s71, %s72
      %p81 = scmp.eq.s32.totalorder %s19, 0
      %p82 = por %p80, %p81
      %p83 = scmp.ne.s32.totalorder %s71, %s72
      %p84 = scmp.eq.s32.totalorder %s20, 1
      %p85 = por %p83, %p84
      %p87 = scmp.ne.s32.totalorder %s72, %s86
      %p88 = scmp.eq.s32.totalorder %s20, 0
      %p89 = por %p87, %p88
      %s91 = sadd.s32 %s90, 1
      %p94 = scmp.eq.s32.totalorder %s14, 1
      %p95 = scmp.ne.s32.totalorder %s90, %s92
      %p96 = scmp.eq.s32.totalorder %s14, 0
      %p97 = por %p95, %p96
      %p98 = scmp.ne.s32.totalorder %s90, %s92
      %p99 = scmp.eq.s32.totalorder %s19, 1
      %p100 = por %p98, %p99
      %p101 = scmp.ne.s32.totalorder %s92, %s93
      %p102 = scmp.eq.s32.totalorder %s19, 0
      %p103 = por %p101, %p102
      %p104 = scmp.ne.s32.totalorder %s92, %s93
      %p105 = scmp.eq.s32.totalorder %s20, 1
      %p106 = por %p104, %p105
      %p108 = scmp.ne.s32.totalorder %s93, %s107
      %p109 = scmp.eq.s32.totalorder %s20, 0
      %p110 = por %p108, %p109
      %s112 = sadd.s32 %s111, 1
      %p115 = scmp.eq.s32.totalorder %s14, 1
      %p116 = scmp.ne.s32.totalorder %s111, %s113
      %p117 = scmp.eq.s32.totalorder %s14, 0
      %p118 = por %p116, %p117
      %p119 = scmp.ne.s32.totalorder %s111, %s113
      %p120 = scmp.eq.s32.totalorder %s19, 1
      %p121 = por %p119, %p120
      %p122 = scmp.ne.s32.totalorder %s113, %s114
      %p123 = scmp.eq.s32.totalorder %s19, 0
      %p124 = por %p122, %p123
      %p125 = scmp.ne.s32.totalorder %s113, %s114
      %p126 = scmp.eq.s32.totalorder %s20, 1
      %p127 = por %p125, %p126
      %p129 = scmp.ne.s32.totalorder %s114, %s128
      %p130 = scmp.eq.s32.totalorder %s20, 0
      %p131 = por %p129, %p130
      %s132 = ssub.s32 %s14, %s21
      %p133 = scmp.eq.s32.totalorder %s132, 0
      %s135 = sadd.s32 %s134, 1
      %s136 = scalar_select %p133, %s134, %s135
      %p139 = pneg %p133
      %p140 = scmp.eq.s32.totalorder %s14, 1
      %p141 = por %p139, %p140
      %p142 = scmp.ne.s32.totalorder %s134, %s137
      %p143 = scmp.eq.s32.totalorder %s14, 0
      %p144 = por %p142, %p143
      %p145 = scmp.ne.s32.totalorder %s134, %s137
      %p146 = scmp.eq.s32.totalorder %s19, 1
      %p147 = por %p145, %p146
      %p148 = scmp.ne.s32.totalorder %s137, %s138
      %p149 = scmp.eq.s32.totalorder %s19, 0
      %p150 = por %p148, %p149
      %p151 = scmp.ne.s32.totalorder %s137, %s138
      %p152 = scmp.eq.s32.totalorder %s20, 1
      %p153 = por %p151, %p152
      %p155 = scmp.ne.s32.totalorder %s138, %s154
      %p156 = scmp.eq.s32.totalorder %s20, 0
      %p157 = por %p155, %p156
      %p158 = scmp.le.s32.totalorder 1, %s14
      %p159 = scmp.lt.s32.totalorder %s14, 3
      %p160 = pnand %p158, %p159
      %p161 = pneg %p160
      // Predicated region
      $region9: #{tpu_custom_call.1} parent=5 // pred_check
        _
      $region10: #{tpu_custom_call.1} parent=5 // pred_check_branch
        %163 = sbr.rel (%p160) target = $region12
      $region11: #{tpu_custom_call.1} parent=5 // pred_region
        %s164 = ssub.s32 %s14, 1
        // Predicated region
        $region13: #{tpu_custom_call.1} parent=11 // pred_check
          %p165 = pneg %p61
        $region14: #{tpu_custom_call.1} parent=11 // pred_check_branch
          %167 = sbr.rel (%p165) target = $region16
        $region15: #{tpu_custom_call.1} parent=11 // pred_region
          _
        $region16: #{tpu_custom_call.1} parent=11 // pred_fallthru
          _
        // Predicated region
        $region17: #{tpu_custom_call.1} parent=11 // pred_check
          %p168 = pneg %p82
        $region18: #{tpu_custom_call.1} parent=11 // pred_check_branch
          %170 = sbr.rel (%p168) target = $region20
        $region19: #{tpu_custom_call.1} parent=11 // pred_region
          _
        $region20: #{tpu_custom_call.1} parent=11 // pred_fallthru
          _
        // Predicated region
        $region21: #{tpu_custom_call.1} parent=11 // pred_check
          %p171 = pneg %p103
        $region22: #{tpu_custom_call.1} parent=11 // pred_check_branch
          %173 = sbr.rel (%p171) target = $region24
        $region23: #{tpu_custom_call.1} parent=11 // pred_region
          _
        $region24: #{tpu_custom_call.1} parent=11 // pred_fallthru
          _
        // Predicated region
        $region25: #{tpu_custom_call.1} parent=11 // pred_check
          %p174 = pneg %p124
        $region26: #{tpu_custom_call.1} parent=11 // pred_check_branch
          %176 = sbr.rel (%p174) target = $region28
        $region27: #{tpu_custom_call.1} parent=11 // pred_region
          _
        $region28: #{tpu_custom_call.1} parent=11 // pred_fallthru
          _
      $region12: #{tpu_custom_call.1} parent=5 // pred_fallthru
        _
      %p177 = scmp.lt.s32.totalorder %s14, 2
      // Predicated region
      $region29: #{tpu_custom_call.1} parent=5 // pred_check
        %p178 = pneg %p177
      $region30: #{tpu_custom_call.1} parent=5 // pred_check_branch
        %180 = sbr.rel (%p178) target = $region32
      $region31: #{tpu_custom_call.1} parent=5 // pred_region
        // Predicated region
        $region33: #{tpu_custom_call.1} parent=31 // pred_check
          %p181 = pneg %p34
        $region34: #{tpu_custom_call.1} parent=31 // pred_check_branch
          %183 = sbr.rel (%p181) target = $region36
        $region35: #{tpu_custom_call.1} parent=31 // pred_region
          %p184 = scmp.lt.s32.totalorder %s14, 1
          %s185 = scalar_select %p184, %s14, 1
          %s186 = smul.addr %s185, 8
          %s187 = scalar_lea.vmem %s0, %s186
        $region36: #{tpu_custom_call.1} parent=31 // pred_fallthru
          _
      $region32: #{tpu_custom_call.1} parent=5 // pred_fallthru
        _
      %p188 = scmp.le.s32.totalorder 1, %s14
      %p189 = scmp.lt.s32.totalorder %s14, 3
      %p190 = pnand %p188, %p189
      %p191 = pneg %p190
      // Predicated region
      $region37: #{tpu_custom_call.1} parent=5 // pred_check
        _
      $region38: #{tpu_custom_call.1} parent=5 // pred_check_branch
        %193 = sbr.rel (%p190) target = $region40
      $region39: #{tpu_custom_call.1} parent=5 // pred_region
        %s194 = ssub.s32 %s14, 1
        %p195 = scmp.lt.s32.totalorder %s19, 1
        %s196 = scalar_select %p195, %s19, 1
        %s197 = smul.addr %s196, 8
        %s198 = scalar_lea.vmem %s0, %s197
        %p199 = pneg %p40
        %p200 = pneg %p37
        %p201 = pneg %p61
        %p202 = pneg %p58
        %p203 = pneg %p82
        %p204 = pneg %p79
        %p205 = pneg %p103
        %p206 = pneg %p100
        %p207 = pneg %p124
        %p208 = pneg %p121
        %p209 = pneg %p150
        %p210 = pneg %p147
        %s211 = sand.u32 %s137, 1
        %s212 = scalar_lea.sflag [#allocation3], %s211
        %s213 = sand.u32 %s137, 1
        %s214 = smul.addr %s213, 8
        %s215 = scalar_lea.vmem [#allocation2], %s214
        %p216 = scmp.lt.s32.totalorder %s19, 1
        %s217 = scalar_select %p216, %s19, 1
        %s218 = smul.addr %s217, 8
        %s219 = scalar_lea.vmem %s0, %s218
        %v220 = vld [vmem:[%s219] sm:$0xff]
        %v221 = vld [vmem:[%s1] sm:$0xff]
        %v222 = vld [vmem:[%s1 + $0x8] sm:$0xff]
        %v223 = vld [vmem:[%s1 + $0x10] sm:$0xff]
        %v224 = vld [vmem:[%s1 + $0x18] sm:$0xff]
        %v225 = vld [vmem:[%s1 + $0x20] sm:$0xff]
        %v226 = vld [vmem:[%s1 + $0x28] sm:$0xff]
        %v227 = vld [vmem:[%s1 + $0x30] sm:$0xff]
        %v228 = vld [vmem:[%s1 + $0x38] sm:$0xff]
        %v229 = vld [vmem:[%s2] sm:$0x3]
        %v231 = vlaneseq
        %v232 = vshrl.u32 %v231, 7
        %v233 = vsub.s32 0, %v232
        %v234 = vrot.slane %v229, %v233
        %v235 = vlaneseq
        %v236 = vshrl.u32 %v235, 7
        %v237 = vsub.s32 1, %v236
        %v238 = vrot.slane %v229, %v237
        %vm241 = vcmask 261120
        %v243 = vsel %vm241, %v220, 0
        %245 = vmatprep.subr.mxu0 %v222
        %246 = vmatpush1.msra.mxu0 %v221
        %247 = vmatprep.subr.mxu0 %v224
        %248 = vmatpush1.msra.mxu0 %v223
        %249 = vmatprep.subr.mxu0 %v226
        %250 = vmatpush1.msra.mxu0 %v225
        %251 = vmatprep.subr.mxu0 %v228
        %252 = vmatpush1.msra.mxu0 %v227
        %253 = vmatprep.subr.mxu0 0.0
        %254 = vmatpush1.msra.mxu0 0.0
        %255 = vmatprep.subr.mxu0 0.0
        %256 = vmatpush1.msra.mxu0 0.0
        %257 = vmatprep.subr.mxu0 0.0
        %258 = vmatpush1.msra.mxu0 0.0
        %259 = vmatprep.subr.mxu0 0.0
        %260 = vmatpush1.msra.mxu0 0.0
        %261 = vmatprep.subr.mxu0 0.0
        %262 = vmatpush1.msra.mxu0 0.0
        %263 = vmatprep.subr.mxu0 0.0
        %264 = vmatpush1.msra.mxu0 0.0
        %265 = vmatprep.subr.mxu0 0.0
        %266 = vmatpush1.msra.mxu0 0.0
        %267 = vmatprep.subr.mxu0 0.0
        %268 = vmatpush1.msra.mxu0 0.0
        %269 = vmatprep.subr.mxu0 0.0
        %270 = vmatpush1.msra.mxu0 0.0
        %271 = vmatprep.subr.mxu0 0.0
        %272 = vmatpush1.msra.mxu0 0.0
        %273 = vmatprep.subr.mxu0 0.0
        %274 = vmatpush1.msra.mxu0 0.0
        %275 = vmatprep.subr.mxu0 0.0
        %276 = vmatpush1.msra.mxu0 0.0
        %277 = vmatprep.subr.mxu0 0.0
        %278 = vmatpush1.msra.mxu0 0.0
        %279 = vmatprep.subr.mxu0 0.0
        %280 = vmatpush1.msra.mxu0 0.0
        %281 = vmatprep.subr.mxu0 0.0
        %282 = vmatpush1.msra.mxu0 0.0
        %283 = vmatprep.subr.mxu0 0.0
        %284 = vmatpush1.msra.mxu0 0.0
        %285 = vmatprep.subr.mxu0 0.0
        %286 = vmatpush1.msra.mxu0 0.0
        %287 = vmatprep.subr.mxu0 0.0
        %288 = vmatpush1.msra.mxu0 0.0
        %289 = vmatprep.subr.mxu0 0.0
        %290 = vmatpush1.msra.mxu0 0.0
        %291 = vmatprep.subr.mxu0 0.0
        %292 = vmatpush1.msra.mxu0 0.0
        %293 = vmatprep.subr.mxu0 0.0
        %294 = vmatpush1.msra.mxu0 0.0
        %295 = vmatprep.subr.mxu0 0.0
        %296 = vmatpush1.msra.mxu0 0.0
        %297 = vmatprep.subr.mxu0 0.0
        %298 = vmatpush1.msra.mxu0 0.0
        %299 = vmatprep.subr.mxu0 0.0
        %300 = vmatpush1.msra.mxu0 0.0
        %301 = vmatprep.subr.mxu0 0.0
        %302 = vmatpush1.msra.mxu0 0.0
        %303 = vmatprep.subr.mxu0 0.0
        %304 = vmatpush1.msra.mxu0 0.0
        %305 = vmatprep.subr.mxu0 0.0
        %306 = vmatpush1.msra.mxu0 0.0
        %307 = vmatprep.subr.mxu0 0.0
        %308 = vmatpush1.msra.mxu0 0.0
        %309 = vmatprep.mubr.f32.mxu0 0.0
        %310 = vmatmul.mubr.f32.gmra.mrb[0].mxu0 %v243
        %v311 = vpop.f32.mrb[0].mxu0
        %v312 = vadd.f32 %v234, %v311
        %v313 = vpop.f32.mrb[0].mxu0
        %v314 = vadd.f32 %v238, %v313
        %315 = vdwg.mxu0
        %v316 = vmul.f32 %v312, 0.5
        %v317 = vmul.f32 %v314, 0.5
        %v318 = vmul.f32 %v312, 0.70710677
        %v319 = vmul.f32 %v314, 0.70710677
        %v320 = verf.f32.pop %v318
        %v321 = verf.f32.pop %v319
        %v322 = vadd.f32 %v320, 1.0
        %v323 = vadd.f32 %v321, 1.0
        %v324 = vmul.f32 %v316, %v322
        %v325 = vmul.f32 %v317, %v323
        %v326 = vld [vmem:[%s3] sm:$0xff]
        %v327 = vld [vmem:[%s3 + $0x8] sm:$0xff]
        %v328 = vld [vmem:[%s3 + $0x10] sm:$0xff]
        %v329 = vld [vmem:[%s3 + $0x18] sm:$0xff]
        %v330 = vld [vmem:[%s3 + $0x20] sm:$0xff]
        %v331 = vld [vmem:[%s3 + $0x28] sm:$0xff]
        %v332 = vld [vmem:[%s3 + $0x30] sm:$0xff]
        %v333 = vld [vmem:[%s3 + $0x38] sm:$0xff]
        %v334 = vld [vmem:[%s3 + $0x40] sm:$0xff]
        %v335 = vld [vmem:[%s3 + $0x48] sm:$0xff]
        %v336 = vld [vmem:[%s3 + $0x50] sm:$0xff]
        %v337 = vld [vmem:[%s3 + $0x58] sm:$0xff]
        %v338 = vld [vmem:[%s3 + $0x60] sm:$0xff]
        %v339 = vld [vmem:[%s3 + $0x68] sm:$0xff]
        %v340 = vld [vmem:[%s3 + $0x70] sm:$0xff]
        %v341 = vld [vmem:[%s3 + $0x78] sm:$0xff]
        %v342 = vld [vmem:[%s3 + $0x80] sm:$0xff]
        %v343 = vld [vmem:[%s3 + $0x88] sm:$0xff]
        %v344 = vld [vmem:[%s3 + $0x90] sm:$0xff]
        %v345 = vld [vmem:[%s3 + $0x98] sm:$0xff]
        %v346 = vld [vmem:[%s3 + $0xa0] sm:$0xff]
        %v347 = vld [vmem:[%s3 + $0xa8] sm:$0xff]
        %v348 = vld [vmem:[%s3 + $0xb0] sm:$0xff]
        %v349 = vld [vmem:[%s3 + $0xb8] sm:$0xff]
        %v350 = vld [vmem:[%s3 + $0xc0] sm:$0xff]
        %v351 = vld [vmem:[%s3 + $0xc8] sm:$0xff]
        %v352 = vld [vmem:[%s3 + $0xd0] sm:$0xff]
        %v353 = vld [vmem:[%s3 + $0xd8] sm:$0xff]
        %v354 = vld [vmem:[%s3 + $0xe0] sm:$0xff]
        %v355 = vld [vmem:[%s3 + $0xe8] sm:$0xff]
        %v356 = vld [vmem:[%s3 + $0xf0] sm:$0xff]
        %v357 = vld [vmem:[%s3 + $0xf8] sm:$0xff]
        %v358 = vld [vmem:[%s4] sm:$0x1]
        %v360 = vlaneseq
        %v361 = vshrl.u32 %v360, 7
        %v362 = vsub.s32 0, %v361
        %v363 = vrot.slane %v358, %v362
        %365 = vmatprep.subr.mxu0 0.0
        %366 = vmatpush1.msra.mxu0 %v326
        %367 = vmatprep.subr.mxu0 0.0
        %368 = vmatpush1.msra.mxu0 %v327
        %369 = vmatprep.subr.mxu0 0.0
        %370 = vmatpush1.msra.mxu0 %v328
        %371 = vmatprep.subr.mxu0 0.0
        %372 = vmatpush1.msra.mxu0 %v329
        %373 = vmatprep.subr.mxu0 0.0
        %374 = vmatpush1.msra.mxu0 %v330
        %375 = vmatprep.subr.mxu0 0.0
        %376 = vmatpush1.msra.mxu0 %v331
        %377 = vmatprep.subr.mxu0 0.0
        %378 = vmatpush1.msra.mxu0 %v332
        %379 = vmatprep.subr.mxu0 0.0
        %380 = vmatpush1.msra.mxu0 %v333
        %381 = vmatprep.subr.mxu0 0.0
        %382 = vmatpush1.msra.mxu0 %v334
        %383 = vmatprep.subr.mxu0 0.0
        %384 = vmatpush1.msra.mxu0 %v335
        %385 = vmatprep.subr.mxu0 0.0
        %386 = vmatpush1.msra.mxu0 %v336
        %387 = vmatprep.subr.mxu0 0.0
        %388 = vmatpush1.msra.mxu0 %v337
        %389 = vmatprep.subr.mxu0 0.0
        %390 = vmatpush1.msra.mxu0 %v338
        %391 = vmatprep.subr.mxu0 0.0
        %392 = vmatpush1.msra.mxu0 %v339
        %393 = vmatprep.subr.mxu0 0.0
        %394 = vmatpush1.msra.mxu0 %v340
        %395 = vmatprep.subr.mxu0 0.0
        %396 = vmatpush1.msra.mxu0 %v341
        %397 = vmatprep.subr.mxu0 0.0
        %398 = vmatpush1.msra.mxu0 %v342
        %399 = vmatprep.subr.mxu0 0.0
        %400 = vmatpush1.msra.mxu0 %v343
        %401 = vmatprep.subr.mxu0 0.0
        %402 = vmatpush1.msra.mxu0 %v344
        %403 = vmatprep.subr.mxu0 0.0
        %404 = vmatpush1.msra.mxu0 %v345
        %405 = vmatprep.subr.mxu0 0.0
        %406 = vmatpush1.msra.mxu0 %v346
        %407 = vmatprep.subr.mxu0 0.0
        %408 = vmatpush1.msra.mxu0 %v347
        %409 = vmatprep.subr.mxu0 0.0
        %410 = vmatpush1.msra.mxu0 %v348
        %411 = vmatprep.subr.mxu0 0.0
        %412 = vmatpush1.msra.mxu0 %v349
        %413 = vmatprep.subr.mxu0 0.0
        %414 = vmatpush1.msra.mxu0 %v350
        %415 = vmatprep.subr.mxu0 0.0
        %416 = vmatpush1.msra.mxu0 %v351
        %417 = vmatprep.subr.mxu0 0.0
        %418 = vmatpush1.msra.mxu0 %v352
        %419 = vmatprep.subr.mxu0 0.0
        %420 = vmatpush1.msra.mxu0 %v353
        %421 = vmatprep.subr.mxu0 0.0
        %422 = vmatpush1.msra.mxu0 %v354
        %423 = vmatprep.subr.mxu0 0.0
        %424 = vmatpush1.msra.mxu0 %v355
        %425 = vmatprep.subr.mxu0 0.0
        %426 = vmatpush1.msra.mxu0 %v356
        %427 = vmatprep.subr.mxu0 0.0
        %428 = vmatpush1.msra.mxu0 %v357
        %429 = vmatprep.mubr.f32.mxu0 %v325
        %430 = vmatmul.mubr.f32.gmra.mrb[0].mxu0 %v324
        %v431 = vpop.f32.mrb[0].mxu0
        %v432 = vadd.f32 %v363, %v431
        %v433 = vpop.f32.mrb[0].mxu0
        %434 = vdwg.mxu0
        %435 = vst.msk [vmem:[%s215] sm:$0xff] %vm241, %v432
        %s436 = sand.u32 %s137, 1
        %s437 = scalar_lea.sflag [#allocation3], %s436
        %s438 = sand.u32 %s137, 1
        %s439 = smul.addr %s438, 8
        %s440 = scalar_lea.vmem [#allocation2], %s439
        // Predicated region
        $region41: #{tpu_custom_call.1} parent=39 // pred_check
          %p441 = pneg %p147
        $region42: #{tpu_custom_call.1} parent=39 // pred_check_branch
          %443 = sbr.rel (%p441) target = $region44
        $region43: #{tpu_custom_call.1} parent=39 // pred_region
          %s445 = ssub.s32 128, 128
          %446 = vsyncadd %s437, %s445
          %s447 = smul.addr %s19, 128
          %s448 = scalar_lea.hbm %s5, %s447
          %s450 = sshll.u32 %s440, 4
          %s451 = int_to_ptr.vmem [resolvable:$true] %s450
          %453 = dma.vmem_to_hbm [thread:$0]  %s451, 128, %s448, %s437
        $region44: #{tpu_custom_call.1} parent=39 // pred_fallthru
          _
      $region40: #{tpu_custom_call.1} parent=5 // pred_fallthru
        _
      %p454 = scmp.le.s32.totalorder 2, %s14
      // Predicated region
      $region45: #{tpu_custom_call.1} parent=5 // pred_check
        %p455 = pneg %p454
      $region46: #{tpu_custom_call.1} parent=5 // pred_check_branch
        %457 = sbr.rel (%p455) target = $region48
      $region47: #{tpu_custom_call.1} parent=5 // pred_region
        %s458 = ssub.s32 %s14, 2
        // Predicated region
        $region49: #{tpu_custom_call.1} parent=47 // pred_check
          %p459 = pneg %p153
        $region50: #{tpu_custom_call.1} parent=47 // pred_check_branch
          %461 = sbr.rel (%p459) target = $region52
        $region51: #{tpu_custom_call.1} parent=47 // pred_region
          %s462 = sand.u32 %s138, 1
          %s463 = scalar_lea.sflag [#allocation3], %s462
          %s464 = sand.u32 %s138, 1
          %s465 = smul.addr %s464, 8
          %s466 = scalar_lea.vmem [#allocation2], %s465
          %467 = dma.done %s463, 128
        $region52: #{tpu_custom_call.1} parent=47 // pred_fallthru
          _
      $region48: #{tpu_custom_call.1} parent=5 // pred_fallthru
        _
    $region6: #{tpu_custom_call.1} parent=1 // loop_footer
      %s18 = sadd.s32 1, %s14
    $region7: #{tpu_custom_call.1} parent=1 // loop_footer_branch
      %13 = sbr.rel target = $region3
    $region8: #{tpu_custom_call.1} parent=1 // loop_exit
      _
    %468 = vsyncpa [#allocation3], 1
    %s469 = scalar_lea.sflag [#allocation3], 1
    %470 = vsyncpa %s469, 1

</llo_original>
